<compile_context>
chip_gen: v7x
topology: tpu7x:2x2x1
jax: 0.10.0
libtpu: 0.0.40
codegen_flags: <defaults>
</compile_context>

<pallas_src>
import functools

import jax
import jax.numpy as jnp
import numpy as np
from jax.experimental import pallas as pl
from jax.experimental.pallas import tpu as pltpu


def _gelu_proj_kernel(x_ref, w_ref, b_ref, o_ref, acc_ref, *, approximate: str):
    """grid = (M tiles, N tiles, K tiles); acc_ref is an f32 (tm, tn) accumulator."""
    k = pl.program_id(2)

    @pl.when(k == 0)
    def _init():
        acc_ref[...] = jnp.zeros_like(acc_ref)

    # Native-dtype operands straight to the MXU, f32 accumulate.
    acc_ref[...] += jnp.dot(
        x_ref[...], w_ref[...], preferred_element_type=jnp.float32
    )

    @pl.when(k == pl.num_programs(2) - 1)
    def _finalize():
        y = acc_ref[...] + b_ref[...].astype(jnp.float32)   # (tm, tn) + (1, tn)
        if approximate == "tanh":
            # F.gelu(..., approximate="tanh"); tanh lands on the EUP.
            c = jnp.float32(0.7978845608028654)              # sqrt(2/pi)
            g = 0.5 * y * (1.0 + jnp.tanh(c * (y + 0.044715 * (y * y * y))))
        else:
            # F.gelu(..., approximate="none"): 0.5*x*(1+erf(x/sqrt(2)))
            inv_sqrt2 = jnp.float32(0.7071067811865476)
            g = 0.5 * y * (1.0 + jax.lax.erf(y * inv_sqrt2))
        o_ref[...] = g.astype(o_ref.dtype)


def _pick_tk(K: int, max_tk: int = 1024) -> int:
    """K tile must divide K exactly (padded K would corrupt valid outputs)."""
    if K <= max_tk:
        return K
    for cand in (1024, 512, 256, 128):
        if cand <= max_tk and K % cand == 0:
            return cand
    # TODO(synk): huge K not a multiple of 128 falls back to a single full-K slab.
    return K


def gelu_proj(x, weight, bias, *, approximate: str = "none",
              tm: int | None = None, tn: int | None = None, tk: int | None = None):
    """
    x:      (..., dim_in)       activations
    weight: (dim_out, dim_in)   PyTorch nn.Linear convention
    bias:   (dim_out,)
    returns (..., dim_out) = gelu(x @ weight.T + bias)
    """
    orig_shape = x.shape
    K = orig_shape[-1]
    N = weight.shape[0]

    x2 = x.reshape(-1, K)                      # (M, K): rows -> sublanes, K -> lanes
    M = x2.shape[0]

    # Tile selection: MXU-filling defaults, full-dim blocks for small shapes.
    if tm is None:
        tm = 256 if M >= 256 else M            # mult. of 8 or == M
    if tn is None:
        tn = 256 if N >= 256 else N            # mult. of 128 (lane-dense) or == N
    if tk is None:
        tk = _pick_tk(K)

    grid = (pl.cdiv(M, tm), pl.cdiv(N, tn), pl.cdiv(K, tk))

    w_t = weight.T                             # (K, N), MXU-friendly layout
    b2 = bias.reshape(1, N)                    # (1, N)
    out_dtype = x.dtype

    kernel = functools.partial(_gelu_proj_kernel, approximate=approximate)

    # VMEM budget: double-buffered x/W/bias tiles + double-buffered output + f32 acc.
    in_isz = jnp.dtype(x.dtype).itemsize
    w_isz = jnp.dtype(weight.dtype).itemsize
    out_isz = jnp.dtype(out_dtype).itemsize
    est_vmem = (2 * (tm * tk * in_isz + tk * tn * w_isz + tn * w_isz)
                + 2 * tm * tn * out_isz
                + tm * tn * 4)
    vmem_limit = int(min(max(3 * est_vmem, 32 * 1024 * 1024), 64 * 1024 * 1024))

    cost = pl.CostEstimate(
        flops=2 * M * K * N,
        transcendentals=M * N,
        bytes_accessed=(M * K) * in_isz + (K * N + N) * w_isz + (M * N) * out_isz,
    )

    out = pl.pallas_call(
        kernel,
        out_shape=jax.ShapeDtypeStruct((M, N), out_dtype),
        grid_spec=pltpu.PrefetchScalarGridSpec(
            num_scalar_prefetch=0,
            grid=grid,
            in_specs=[
                pl.BlockSpec((tm, tk), lambda i, j, k: (i, k)),   # x tile
                pl.BlockSpec((tk, tn), lambda i, j, k: (k, j)),   # W^T tile
                pl.BlockSpec((1, tn), lambda i, j, k: (0, j)),    # bias tile
            ],
            out_specs=pl.BlockSpec((tm, tn), lambda i, j, k: (i, j)),
            scratch_shapes=[pltpu.VMEM((tm, tn), jnp.float32)],
        ),
        compiler_params=pltpu.CompilerParams(
            dimension_semantics=("parallel", "parallel", "arbitrary"),
            vmem_limit_bytes=vmem_limit,
        ),
        cost_estimate=cost,
    )(x2, w_t, b2)

    return out.reshape(*orig_shape[:-1], N)


def _ref_gelu_proj(x, weight, bias, approximate):
    y = x @ weight.T + bias
    if approximate == "tanh":
        c = 0.7978845608028654
        return 0.5 * y * (1.0 + jnp.tanh(c * (y + 0.044715 * y ** 3)))
    return 0.5 * y * (1.0 + jax.lax.erf(y * 0.7071067811865476))


if __name__ == "__main__":
    # Shapes consistent with the module: (batch, seq, dim_in) -> (batch, seq, dim_out)
    batch, seq, dim_in, dim_out = 2, 8, 32, 64

    key = jax.random.PRNGKey(0)
    kx, kw, kb = jax.random.split(key, 3)

    x = jax.random.normal(kx, (batch, seq, dim_in), dtype=jnp.float32)
    bound = 1.0 / (dim_in ** 0.5)
    weight = jax.random.uniform(kw, (dim_out, dim_in), jnp.float32, -bound, bound)
    bias = jax.random.uniform(kb, (dim_out,), jnp.float32, -bound, bound)

    # Default module config: exact erf-based GELU.
    y = gelu_proj(x, weight, bias, approximate="none")
    jax.block_until_ready(y)
    assert y.shape == (batch, seq, dim_out)
    np.testing.assert_allclose(
        np.asarray(y), np.asarray(_ref_gelu_proj(x, weight, bias, "none")),
        rtol=1e-5, atol=1e-5)

    # tanh-approximation branch.
    y_tanh = gelu_proj(x, weight, bias, approximate="tanh")
    jax.block_until_ready(y_tanh)
    np.testing.assert_allclose(
        np.asarray(y_tanh), np.asarray(_ref_gelu_proj(x, weight, bias, "tanh")),
        rtol=1e-5, atol=1e-5)

    # Exercise the multi-tile path (ragged M block, tiled N, K-reduction accumulator)
    # at still-small sizes.
    M2, K2, N2 = 20, 256, 128
    x2 = jax.random.normal(kx, (M2, K2), dtype=jnp.float32)
    bound2 = 1.0 / (K2 ** 0.5)
    w2 = jax.random.uniform(kw, (N2, K2), jnp.float32, -bound2, bound2)
    b2 = jax.random.uniform(kb, (N2,), jnp.float32, -bound2, bound2)
    y2 = gelu_proj(x2, w2, b2, approximate="none", tm=8, tn=128, tk=128)
    jax.block_until_ready(y2)
    np.testing.assert_allclose(
        np.asarray(y2), np.asarray(_ref_gelu_proj(x2, w2, b2, "none")),
        rtol=1e-4, atol=1e-5)

    print("KERNEL_OK")
</pallas_src>

<mosaic_0001>
module attributes {stable_mosaic.version = 11 : i64} {
  func.func @_gelu_proj_kernel(%arg0: i32, %arg1: i32, %arg2: i32, %arg3: memref<16x32xf32, #tpu.memory_space<vmem>>, %arg4: memref<32x64xf32, #tpu.memory_space<vmem>>, %arg5: memref<1x64xf32, #tpu.memory_space<vmem>>, %arg6: memref<16x64xf32, #tpu.memory_space<vmem>>, %arg7: memref<16x64xf32, #tpu.memory_space<vmem>>) attributes {dimension_semantics = [#tpu.dimension_semantics<parallel>, #tpu.dimension_semantics<parallel>, #tpu.dimension_semantics<arbitrary>], iteration_bounds = array<i64: 1, 1, 1>, scalar_prefetch = 0 : i64, scratch_operands = 1 : i64, tpu.core_type = #tpu.core_type<tc>, window_params = [{transform_indices = @transform_0, window_bounds = array<i64: 16, 32>}, {transform_indices = @transform_1, window_bounds = array<i64: 32, 64>}, {transform_indices = @transform_2, window_bounds = array<i64: 1, 64>}, {transform_indices = @transform_3, window_bounds = array<i64: 16, 64>}]} {
    %c0_i32 = arith.constant 0 : i32
    %0 = arith.cmpi eq, %arg2, %c0_i32 : i32
    %1 = arith.extui %0 : i1 to i32
    %c0_i32_0 = arith.constant 0 : i32
    %2 = arith.cmpi ne, %1, %c0_i32_0 : i32
    scf.if %2 {
      %cst_10 = arith.constant 0.000000e+00 : f32
      %12 = vector.broadcast %cst_10 : f32 to vector<16x64xf32>
      %c0_11 = arith.constant 0 : index
      %c0_12 = arith.constant 0 : index
      %13 = vector.load %arg7[%c0_11, %c0_12] : memref<16x64xf32, #tpu.memory_space<vmem>>, vector<16x64xf32>
      tpu.vector_store %arg7[%c0_11, %c0_12], %12 {strides = array<i32>} : memref<16x64xf32, #tpu.memory_space<vmem>>, vector<16x64xf32>,
    } else {
    }
    %c0 = arith.constant 0 : index
    %c0_1 = arith.constant 0 : index
    %3 = vector.load %arg7[%c0, %c0_1] : memref<16x64xf32, #tpu.memory_space<vmem>>, vector<16x64xf32>
    %c0_2 = arith.constant 0 : index
    %c0_3 = arith.constant 0 : index
    %4 = vector.load %arg3[%c0_2, %c0_3] : memref<16x32xf32, #tpu.memory_space<vmem>>, vector<16x32xf32>
    %c0_4 = arith.constant 0 : index
    %c0_5 = arith.constant 0 : index
    %5 = vector.load %arg4[%c0_4, %c0_5] : memref<32x64xf32, #tpu.memory_space<vmem>>, vector<32x64xf32>
    %cst = arith.constant dense<0.000000e+00> : vector<16x64xf32>
    %6 = tpu.matmul %4, %5, %cst {dimension_numbers = #tpu.dot_dimension_numbers<[1], [0], [0], [1], [0, 0, 1, 1], [], []>} : vector<16x32xf32>, vector<32x64xf32>, vector<16x64xf32> -> vector<16x64xf32>
    %7 = arith.addf %3, %6 : vector<16x64xf32>
    %c0_6 = arith.constant 0 : index
    %c0_7 = arith.constant 0 : index
    %8 = vector.load %arg7[%c0_6, %c0_7] : memref<16x64xf32, #tpu.memory_space<vmem>>, vector<16x64xf32>
    tpu.vector_store %arg7[%c0_6, %c0_7], %7 {strides = array<i32>} : memref<16x64xf32, #tpu.memory_space<vmem>>, vector<16x64xf32>,
    %c0_i32_8 = arith.constant 0 : i32
    %9 = arith.cmpi eq, %arg2, %c0_i32_8 : i32
    %10 = arith.extui %9 : i1 to i32
    %c0_i32_9 = arith.constant 0 : i32
    %11 = arith.cmpi ne, %10, %c0_i32_9 : i32
    scf.if %11 {
      %c0_10 = arith.constant 0 : index
      %c0_11 = arith.constant 0 : index
      %12 = vector.load %arg7[%c0_10, %c0_11] : memref<16x64xf32, #tpu.memory_space<vmem>>, vector<16x64xf32>
      %c0_12 = arith.constant 0 : index
      %c0_13 = arith.constant 0 : index
      %13 = vector.load %arg5[%c0_12, %c0_13] : memref<1x64xf32, #tpu.memory_space<vmem>>, vector<1x64xf32>
      %14 = vector.broadcast %13 : vector<1x64xf32> to vector<16x64xf32>
      %15 = arith.addf %12, %14 : vector<16x64xf32>
      %cst_14 = arith.constant 5.000000e-01 : f32
      %16 = vector.broadcast %cst_14 : f32 to vector<16x64xf32>
      %17 = arith.mulf %16, %15 : vector<16x64xf32>
      %cst_15 = arith.constant 0.707106769 : f32
      %18 = vector.broadcast %cst_15 : f32 to vector<16x64xf32>
      %19 = arith.mulf %15, %18 : vector<16x64xf32>
      %20 = math.erf %19 : vector<16x64xf32>
      %cst_16 = arith.constant 1.000000e+00 : f32
      %21 = vector.broadcast %cst_16 : f32 to vector<16x64xf32>
      %22 = arith.addf %21, %20 : vector<16x64xf32>
      %23 = arith.mulf %17, %22 : vector<16x64xf32>
      %c0_17 = arith.constant 0 : index
      %c0_18 = arith.constant 0 : index
      %24 = vector.load %arg6[%c0_17, %c0_18] : memref<16x64xf32, #tpu.memory_space<vmem>>, vector<16x64xf32>
      tpu.vector_store %arg6[%c0_17, %c0_18], %23 {strides = array<i32>} : memref<16x64xf32, #tpu.memory_space<vmem>>, vector<16x64xf32>,
    } else {
    }
    return
  }
  func.func @transform_0(%arg0: i32, %arg1: i32, %arg2: i32) -> (i32, i32) {
    %c0_i32 = arith.constant 0 : i32
    return %arg0, %arg2 : i32, i32
  }
  func.func @transform_1(%arg0: i32, %arg1: i32, %arg2: i32) -> (i32, i32) {
    %c0_i32 = arith.constant 0 : i32
    return %arg2, %arg1 : i32, i32
  }
  func.func @transform_2(%arg0: i32, %arg1: i32, %arg2: i32) -> (i32, i32) {
    %c0_i32 = arith.constant 0 : i32
    %c0_i32_0 = arith.constant 0 : i32
    return %c0_i32, %arg1 : i32, i32
  }
  func.func @transform_3(%arg0: i32, %arg1: i32, %arg2: i32) -> (i32, i32) {
    %c0_i32 = arith.constant 0 : i32
    return %arg0, %arg1 : i32, i32
  }
}

</mosaic_0001>

<llo_original>
// kernel: tpu_custom_call.1
$region0: #{tpu_custom_call.1}
  #allocation0 [shape = 'u32[]', space=smem, size = 0x4, offset = 0x4, fixed_abs, tag = 'smem constant byte address 0x4 - core index']
  #allocation1 [shape = 'u32[144,128]{1,0:T(1,128)}', space=vmem, size = 0x12000, scoped, tag = 'internal scratch']
  #allocation2 [shape = 'f32[16,64]{1,0:T(8,128)}', space=vmem, size = 0x2000, scoped, tag = 'scratch operand']
  %s0 = inlined_call_operand.hbm [shape: f32[16,32], index: 0, kind: input, shape index: {}]
  %s1 = inlined_call_operand.hbm [shape: f32[32,64], index: 1, kind: input, shape index: {}]
  %s2 = inlined_call_operand.vmem [shape: f32[1,64], index: 2, kind: input, shape index: {}]
  %s3 = inlined_call_operand.hbm [shape: f32[16,64], index: 3, kind: output, shape index: {}]
  %s4 = sld [smem:[#allocation0]]
  $region38: #{tpu_custom_call.1} parent=0
    _
  %s6 = ssub.s32 1, %s4
  %s7 = scalar_select 0, %s6, %s4
  $region1: #{tpu_custom_call.1} parent=0
    #allocation3 [shape = 'u8[8192]{0}', space=vmem, size = 0x2000, scoped, tag = 'input window, operand 0, single buffered']
    #allocation4 [shape = 's32[1]{0}', space=sflag, size = 0x4, scoped, tag = 'scoped memory for tpu_custom_call.1']
    #allocation5 [shape = 's32[1]{0}', space=sflag, size = 0x4, scoped, tag = 'scoped memory for tpu_custom_call.1']
    #allocation6 [shape = 'u8[16384]{0}', space=vmem, size = 0x4000, scoped, tag = 'input window, operand 1, single buffered']
    #allocation7 [shape = 's32[1]{0}', space=sflag, size = 0x4, scoped, tag = 'scoped memory for tpu_custom_call.1']
    #allocation8 [shape = 'u8[8192]{0}', space=vmem, size = 0x2000, scoped, tag = 'output window, operand 0, single buffered']
    %8 = vsyncpa [#allocation4], 0
    %9 = vsyncpa [#allocation7], 0
    %10 = vsyncpa [#allocation5], 0
    // Predicated region
    $region2: #{tpu_custom_call.1} parent=1 // pred_check
      _
    $region3: #{tpu_custom_call.1} parent=1 // pred_check_branch
      %12 = sbr.rel (0) target = $region5
    $region4: #{tpu_custom_call.1} parent=1 // pred_region
      %s14 = ssub.s32 256, 256
      %15 = vsyncadd [#allocation4], %s14
      %s16 = sshll.u32 [#allocation3], 4
      %s17 = int_to_ptr.vmem [resolvable:$true] %s16
      %22 = dma.hbm_to_vmem [thread:$0]  %s0, 256, %s17, [#allocation4], 128, 128, 8
    $region5: #{tpu_custom_call.1} parent=1 // pred_fallthru
      _
    // Predicated region
    $region6: #{tpu_custom_call.1} parent=1 // pred_check
      _
    $region7: #{tpu_custom_call.1} parent=1 // pred_check_branch
      %24 = sbr.rel (0) target = $region9
    $region8: #{tpu_custom_call.1} parent=1 // pred_region
      %s26 = ssub.s32 512, 512
      %27 = vsyncadd [#allocation7], %s26
      %s28 = sshll.u32 [#allocation6], 4
      %s29 = int_to_ptr.vmem [resolvable:$true] %s28
      %34 = dma.hbm_to_vmem [thread:$0]  %s1, 512, %s29, [#allocation7], 128, 128, 8
    $region9: #{tpu_custom_call.1} parent=1 // pred_fallthru
      _
    // Predicated region
    $region10: #{tpu_custom_call.1} parent=1 // pred_check
      _
    $region11: #{tpu_custom_call.1} parent=1 // pred_check_branch
      %36 = sbr.rel (0) target = $region13
    $region12: #{tpu_custom_call.1} parent=1 // pred_region
      _
    $region13: #{tpu_custom_call.1} parent=1 // pred_fallthru
      _
    // Predicated region
    $region14: #{tpu_custom_call.1} parent=1 // pred_check
      _
    $region15: #{tpu_custom_call.1} parent=1 // pred_check_branch
      %38 = sbr.rel (0) target = $region17
    $region16: #{tpu_custom_call.1} parent=1 // pred_region
      %39 = dma.done [#allocation4], 256
    $region17: #{tpu_custom_call.1} parent=1 // pred_fallthru
      _
    // Predicated region
    $region18: #{tpu_custom_call.1} parent=1 // pred_check
      _
    $region19: #{tpu_custom_call.1} parent=1 // pred_check_branch
      %41 = sbr.rel (0) target = $region21
    $region20: #{tpu_custom_call.1} parent=1 // pred_region
      %42 = dma.done [#allocation7], 512
    $region21: #{tpu_custom_call.1} parent=1 // pred_fallthru
      _
    %p43 = scmp.eq.s32.totalorder 0, 0
    // Predicated region
    $region22: #{tpu_custom_call.1} parent=1 // pred_check
      %p44 = pneg %p43
    $region23: #{tpu_custom_call.1} parent=1 // pred_check_branch
      %46 = sbr.rel (%p44) target = $region25
    $region24: #{tpu_custom_call.1} parent=1 // pred_region
      %vm47 = vcmask 523264
      %48 = vst.msk [vmem:[#allocation2] sm:$0xff] %vm47, 0.0
      %49 = vst.msk [vmem:[#allocation2 + $0x8] sm:$0xff] %vm47, 0.0
    $region25: #{tpu_custom_call.1} parent=1 // pred_fallthru
      _
    %v50 = vld [vmem:[#allocation2] sm:$0xff]
    %v51 = vld [vmem:[#allocation2 + $0x8] sm:$0xff]
    %v52 = vld [vmem:[#allocation3] sm:$0xff]
    %v53 = vld [vmem:[#allocation3 + $0x8] sm:$0xff]
    %v54 = vld [vmem:[#allocation6] sm:$0xff]
    %v55 = vld [vmem:[#allocation6 + $0x8] sm:$0xff]
    %v56 = vld [vmem:[#allocation6 + $0x10] sm:$0xff]
    %v57 = vld [vmem:[#allocation6 + $0x18] sm:$0xff]
    %vm58 = vcmask 261120
    %v60 = vsel %vm58, %v52, 0
    %v63 = vsel %vm58, %v53, 0
    %65 = vmatprep.subr.mxu0 0.0
    %66 = vmatpush1.msra.mxu0 %v54
    %67 = vmatprep.subr.mxu0 0.0
    %68 = vmatpush1.msra.mxu0 %v55
    %69 = vmatprep.subr.mxu0 0.0
    %70 = vmatpush1.msra.mxu0 %v56
    %71 = vmatprep.subr.mxu0 0.0
    %72 = vmatpush1.msra.mxu0 %v57
    %73 = vmatprep.subr.mxu0 0.0
    %74 = vmatpush1.msra.mxu0 0.0
    %75 = vmatprep.subr.mxu0 0.0
    %76 = vmatpush1.msra.mxu0 0.0
    %77 = vmatprep.subr.mxu0 0.0
    %78 = vmatpush1.msra.mxu0 0.0
    %79 = vmatprep.subr.mxu0 0.0
    %80 = vmatpush1.msra.mxu0 0.0
    %81 = vmatprep.subr.mxu0 0.0
    %82 = vmatpush1.msra.mxu0 0.0
    %83 = vmatprep.subr.mxu0 0.0
    %84 = vmatpush1.msra.mxu0 0.0
    %85 = vmatprep.subr.mxu0 0.0
    %86 = vmatpush1.msra.mxu0 0.0
    %87 = vmatprep.subr.mxu0 0.0
    %88 = vmatpush1.msra.mxu0 0.0
    %89 = vmatprep.subr.mxu0 0.0
    %90 = vmatpush1.msra.mxu0 0.0
    %91 = vmatprep.subr.mxu0 0.0
    %92 = vmatpush1.msra.mxu0 0.0
    %93 = vmatprep.subr.mxu0 0.0
    %94 = vmatpush1.msra.mxu0 0.0
    %95 = vmatprep.subr.mxu0 0.0
    %96 = vmatpush1.msra.mxu0 0.0
    %97 = vmatprep.subr.mxu0 0.0
    %98 = vmatpush1.msra.mxu0 0.0
    %99 = vmatprep.subr.mxu0 0.0
    %100 = vmatpush1.msra.mxu0 0.0
    %101 = vmatprep.subr.mxu0 0.0
    %102 = vmatpush1.msra.mxu0 0.0
    %103 = vmatprep.subr.mxu0 0.0
    %104 = vmatpush1.msra.mxu0 0.0
    %105 = vmatprep.subr.mxu0 0.0
    %106 = vmatpush1.msra.mxu0 0.0
    %107 = vmatprep.subr.mxu0 0.0
    %108 = vmatpush1.msra.mxu0 0.0
    %109 = vmatprep.subr.mxu0 0.0
    %110 = vmatpush1.msra.mxu0 0.0
    %111 = vmatprep.subr.mxu0 0.0
    %112 = vmatpush1.msra.mxu0 0.0
    %113 = vmatprep.subr.mxu0 0.0
    %114 = vmatpush1.msra.mxu0 0.0
    %115 = vmatprep.subr.mxu0 0.0
    %116 = vmatpush1.msra.mxu0 0.0
    %117 = vmatprep.subr.mxu0 0.0
    %118 = vmatpush1.msra.mxu0 0.0
    %119 = vmatprep.subr.mxu0 0.0
    %120 = vmatpush1.msra.mxu0 0.0
    %121 = vmatprep.subr.mxu0 0.0
    %122 = vmatpush1.msra.mxu0 0.0
    %123 = vmatprep.subr.mxu0 0.0
    %124 = vmatpush1.msra.mxu0 0.0
    %125 = vmatprep.subr.mxu0 0.0
    %126 = vmatpush1.msra.mxu0 0.0
    %127 = vmatprep.subr.mxu0 0.0
    %128 = vmatpush1.msra.mxu0 0.0
    %129 = vmatprep.mubr.f32.mxu0 0.0
    %130 = vmatmul.mubr.f32.gmra.mrb[0].mxu0 %v60
    %v131 = vpop.f32.mrb[0].mxu0
    %v132 = vadd.f32 0.0, %v131
    %v133 = vpop.f32.mrb[0].mxu0
    %134 = vmatprep.mubr.f32.mxu0 0.0
    %135 = vmatmul.mubr.f32.gmra.mrb[0].mxu0 %v63
    %v136 = vpop.f32.mrb[0].mxu0
    %v137 = vadd.f32 0.0, %v136
    %v138 = vpop.f32.mrb[0].mxu0
    %139 = vdwg.mxu0
    %v140 = vadd.f32 %v50, %v132
    %v141 = vadd.f32 %v51, %v137
    %vm142 = vcmask 523264
    %143 = vst.msk [vmem:[#allocation2] sm:$0xff] %vm142, %v140
    %144 = vst.msk [vmem:[#allocation2 + $0x8] sm:$0xff] %vm142, %v141
    // Predicated region
    $region26: #{tpu_custom_call.1} parent=1 // pred_check
      %p145 = pneg %p43
    $region27: #{tpu_custom_call.1} parent=1 // pred_check_branch
      %147 = sbr.rel (%p145) target = $region29
    $region28: #{tpu_custom_call.1} parent=1 // pred_region
      %v148 = vld [vmem:[#allocation2] sm:$0xff]
      %v149 = vld [vmem:[#allocation2 + $0x8] sm:$0xff]
      %v150 = vld [vmem:[%s2] sm:$0x1]
      %v152 = vlaneseq
      %v153 = vshrl.u32 %v152, 7
      %v154 = vsub.s32 0, %v153
      %v155 = vrot.slane %v150, %v154
      %v157 = vadd.f32 %v148, %v155
      %v158 = vadd.f32 %v149, %v155
      %v159 = vmul.f32 %v157, 0.5
      %v160 = vmul.f32 %v158, 0.5
      %v161 = vmul.f32 %v157, 0.70710677
      %v162 = vmul.f32 %v158, 0.70710677
      %v163 = verf.f32.pop %v161
      %v164 = verf.f32.pop %v162
      %v165 = vadd.f32 %v163, 1.0
      %v166 = vadd.f32 %v164, 1.0
      %v167 = vmul.f32 %v159, %v165
      %v168 = vmul.f32 %v160, %v166
      %169 = vst.msk [vmem:[#allocation8] sm:$0xff] %vm142, %v167
      %170 = vst.msk [vmem:[#allocation8 + $0x8] sm:$0xff] %vm142, %v168
    $region29: #{tpu_custom_call.1} parent=1 // pred_fallthru
      _
    // Predicated region
    $region30: #{tpu_custom_call.1} parent=1 // pred_check
      _
    $region31: #{tpu_custom_call.1} parent=1 // pred_check_branch
      %172 = sbr.rel (0) target = $region33
    $region32: #{tpu_custom_call.1} parent=1 // pred_region
      %s174 = ssub.s32 256, 256
      %175 = vsyncadd [#allocation5], %s174
      %s176 = sshll.u32 [#allocation8], 4
      %s177 = int_to_ptr.vmem [resolvable:$true] %s176
      %182 = dma.vmem_to_hbm [thread:$0]  %s177, 256, %s3, [#allocation5], 128, 128, 8
    $region33: #{tpu_custom_call.1} parent=1 // pred_fallthru
      _
    // Predicated region
    $region34: #{tpu_custom_call.1} parent=1 // pred_check
      _
    $region35: #{tpu_custom_call.1} parent=1 // pred_check_branch
      %184 = sbr.rel (0) target = $region37
    $region36: #{tpu_custom_call.1} parent=1 // pred_region
      %185 = dma.done [#allocation5], 256
    $region37: #{tpu_custom_call.1} parent=1 // pred_fallthru
      _
    %186 = vsyncpa [#allocation4], 1
    %187 = vsyncpa [#allocation7], 1
    %188 = vsyncpa [#allocation5], 1

</llo_original>
